<compile_context>
chip_gen: v7x
topology: tpu7x:2x2x1
jax: 0.10.0
libtpu: 0.0.40
codegen_flags: <defaults>
</compile_context>

<pallas_src>
import functools

import jax
import jax.numpy as jnp
from jax import lax
from jax.experimental import pallas as pl
from jax.experimental.pallas import tpu as pltpu

EPS = 1e-5                      # PyTorch LayerNorm default eps
ROW_TILE_CAP = 256              # rows per grid step for the matmul / norm kernels
VMEM_LIMIT = 48 * 1024 * 1024   # < 64 MiB so it is safe on v7x as well as v5e/v6e


def _row_tiling(M):
    """Pick a row tile (multiple of 8, capped) and the padded row count."""
    tm = min(ROW_TILE_CAP, max(8, ((M + 7) // 8) * 8))
    Mp = ((M + tm - 1) // tm) * tm
    return tm, Mp


def _pad_rows(x, Mp):
    M = x.shape[0]
    return x if Mp == M else jnp.pad(x, ((0, Mp - M), (0, 0)))


# ----------------------------- Pallas kernels -----------------------------

def _matmul_bias_kernel(*refs, fuse_ln):
    if fuse_ln:
        x_ref, w_ref, b_ref, g_ref, bb_ref, o_ref = refs
    else:
        x_ref, w_ref, b_ref, o_ref = refs
    # bf16 MXU matmul, f32 accumulation.
    y = jnp.dot(x_ref[...].astype(jnp.bfloat16), w_ref[...],
                preferred_element_type=jnp.float32) + b_ref[...]
    if fuse_ln:  # fused post-matmul LayerNorm epilogue (free VPU work)
        mu = jnp.mean(y, axis=-1, keepdims=True)
        yc = y - mu
        var = jnp.mean(yc * yc, axis=-1, keepdims=True)
        y = yc * lax.rsqrt(var + EPS) * g_ref[...] + bb_ref[...]
    o_ref[...] = y


def matmul_bias(x, w, b, ln_gb=None):
    """x:(M,K) @ w:(K,N) + b:(N,), optionally followed by LayerNorm over N."""
    M, K = x.shape
    N = w.shape[1]
    tm, Mp = _row_tiling(M)
    xp = _pad_rows(x, Mp)
    fuse_ln = ln_gb is not None
    row = lambda i: (i, 0)
    full = lambda i: (0, 0)
    in_specs = [pl.BlockSpec((tm, K), row),
                pl.BlockSpec((K, N), full),
                pl.BlockSpec((1, N), full)]
    args = [xp, w.astype(jnp.bfloat16), b.reshape(1, N)]
    if fuse_ln:
        g, bb = ln_gb
        in_specs += [pl.BlockSpec((1, N), full), pl.BlockSpec((1, N), full)]
        args += [g.reshape(1, N), bb.reshape(1, N)]
    out = pl.pallas_call(
        functools.partial(_matmul_bias_kernel, fuse_ln=fuse_ln),
        out_shape=jax.ShapeDtypeStruct((Mp, N), jnp.float32),
        grid=(Mp // tm,),
        in_specs=in_specs,
        out_specs=pl.BlockSpec((tm, N), row),
        compiler_params=pltpu.CompilerParams(
            dimension_semantics=("parallel",),
            vmem_limit_bytes=VMEM_LIMIT),
    )(*args)
    return out[:M] if Mp != M else out


def _layernorm_kernel(x_ref, g_ref, b_ref, o_ref):
    x = x_ref[...]
    mu = jnp.mean(x, axis=-1, keepdims=True)
    xc = x - mu
    var = jnp.mean(xc * xc, axis=-1, keepdims=True)
    o_ref[...] = xc * lax.rsqrt(var + EPS) * g_ref[...] + b_ref[...]


def layernorm(x, g, b):
    """Standalone LayerNorm (only used as a fallback; norms are fused elsewhere)."""
    M, C = x.shape
    tm, Mp = _row_tiling(M)
    xp = _pad_rows(x, Mp)
    out = pl.pallas_call(
        _layernorm_kernel,
        out_shape=jax.ShapeDtypeStruct((Mp, C), jnp.float32),
        grid=(Mp // tm,),
        in_specs=[pl.BlockSpec((tm, C), lambda i: (i, 0)),
                  pl.BlockSpec((1, C), lambda i: (0, 0)),
                  pl.BlockSpec((1, C), lambda i: (0, 0))],
        out_specs=pl.BlockSpec((tm, C), lambda i: (i, 0)),
        compiler_params=pltpu.CompilerParams(
            dimension_semantics=("parallel",),
            vmem_limit_bytes=VMEM_LIMIT),
    )(xp, g.reshape(1, C), b.reshape(1, C))
    return out[:M] if Mp != M else out


def _dwconv_ln_kernel(x_ref, w_ref, b_ref, g_ref, bb_ref, o_ref, xp_ref):
    # x_ref: (1, H, W, C) unpadded; xp_ref: (H+K-1, W+K-1, C) VMEM scratch.
    # Computes y = LayerNorm_C(dwconv7x7(x) + bias) * gamma + beta, emitted in
    # bf16 (exactly the operand the following MXU matmul consumes).
    _, H, W, C = x_ref.shape
    K = w_ref.shape[0]
    pad = K // 2
    # Halo padding happens in VMEM (no HBM-side jnp.pad round trip).
    xp_ref[...] = jnp.zeros_like(xp_ref)
    xp_ref[pad:pad + H, pad:pad + W, :] = x_ref[0]
    xp = xp_ref[...]
    wts = w_ref[...]
    acc = jnp.zeros((H, W, C), jnp.float32)
    for kh in range(K):            # static unroll over the 7x7 taps (VPU FMAs)
        for kw in range(K):
            acc = acc + xp[kh:kh + H, kw:kw + W, :] * wts[kh, kw][None, None, :]
    d = acc + b_ref[...]
    # Fused pre-MLP LayerNorm over the channel (lane) axis, f32 math.
    mu = jnp.mean(d, axis=-1, keepdims=True)
    dc = d - mu
    var = jnp.mean(dc * dc, axis=-1, keepdims=True)
    y = dc * lax.rsqrt(var + EPS) * g_ref[...] + bb_ref[...]
    o_ref[0] = y.astype(jnp.bfloat16)


def dwconv_ln(grid_nhwc, w, b, g, beta, ksize):
    """Depthwise conv (stride 1, 'same' padding) + bias + LayerNorm, bf16 out."""
    B, H, W, C = grid_nhwc.shape
    pad = ksize // 2
    Hp, Wp = H + 2 * pad, W + 2 * pad
    full3 = lambda i: (0, 0, 0)
    return pl.pallas_call(
        _dwconv_ln_kernel,
        out_shape=jax.ShapeDtypeStruct((B, H, W, C), jnp.bfloat16),
        grid=(B,),
        in_specs=[pl.BlockSpec((1, H, W, C), lambda i: (i, 0, 0, 0)),
                  pl.BlockSpec((ksize, ksize, C), full3),
                  pl.BlockSpec((1, 1, C), full3),
                  pl.BlockSpec((1, 1, C), full3),
                  pl.BlockSpec((1, 1, C), full3)],
        out_specs=pl.BlockSpec((1, H, W, C), lambda i: (i, 0, 0, 0)),
        scratch_shapes=[pltpu.VMEM((Hp, Wp, C), jnp.float32)],
        compiler_params=pltpu.CompilerParams(
            dimension_semantics=("parallel",),
            vmem_limit_bytes=VMEM_LIMIT),
    )(grid_nhwc, w, b.reshape(1, 1, C), g.reshape(1, 1, C), beta.reshape(1, 1, C))


def _block_mlp_kernel(*refs, fdim, final_ln):
    # gated MLP + residual (the pre-norm already happened in the conv kernel):
    #   o = res + W2( silu(W1 y) * (Wg y) ),   y = LN(dwconv(x))  (bf16 input)
    # W1 and Wg are fused into a single (C, 2F) weight -> one MXU dot.
    if final_ln:
        (res_ref, y_ref, w12_ref, b12_ref,
         w2_ref, b2_ref, fg_ref, fb_ref, o_ref) = refs
    else:
        (res_ref, y_ref, w12_ref, b12_ref, w2_ref, b2_ref, o_ref) = refs
    h12 = jnp.dot(y_ref[...], w12_ref[...],
                  preferred_element_type=jnp.float32) + b12_ref[...]
    h1 = h12[:, :fdim]
    hg = h12[:, fdim:]
    h = (h1 * jax.nn.sigmoid(h1)) * hg             # silu(main) * gate, f32 VPU
    out = jnp.dot(h.astype(jnp.bfloat16), w2_ref[...],
                  preferred_element_type=jnp.float32) + b2_ref[...]
    out = res_ref[...] + out
    if final_ln:  # fused embedding LayerNorm (only on the network's last block)
        mu2 = jnp.mean(out, axis=-1, keepdims=True)
        oc = out - mu2
        var2 = jnp.mean(oc * oc, axis=-1, keepdims=True)
        out = oc * lax.rsqrt(var2 + EPS) * fg_ref[...] + fb_ref[...]
    o_ref[...] = out


def block_mlp(res, y, p, final_ln=None):
    """res:(M,C) f32 residual, y:(M,C) bf16 = LN(dwconv(x)) from dwconv_ln."""
    M, C = res.shape
    F2 = p['w12'].shape[1]
    fdim = F2 // 2
    tm, Mp = _row_tiling(M)
    resp = _pad_rows(res, Mp)
    yp = _pad_rows(y, Mp)
    row = lambda i: (i, 0)
    full = lambda i: (0, 0)
    fuse_final = final_ln is not None
    in_specs = [pl.BlockSpec((tm, C), row),
                pl.BlockSpec((tm, C), row),
                pl.BlockSpec((C, F2), full),
                pl.BlockSpec((1, F2), full),
                pl.BlockSpec((fdim, C), full),
                pl.BlockSpec((1, C), full)]
    args = [resp, yp,
            p['w12'].astype(jnp.bfloat16), p['b12'].reshape(1, F2),
            p['w2'].astype(jnp.bfloat16), p['b2'].reshape(1, C)]
    if fuse_final:
        fg, fb = final_ln
        in_specs += [pl.BlockSpec((1, C), full), pl.BlockSpec((1, C), full)]
        args += [fg.reshape(1, C), fb.reshape(1, C)]
    out = pl.pallas_call(
        functools.partial(_block_mlp_kernel, fdim=fdim, final_ln=fuse_final),
        out_shape=jax.ShapeDtypeStruct((Mp, C), jnp.float32),
        grid=(Mp // tm,),
        in_specs=in_specs,
        out_specs=pl.BlockSpec((tm, C), row),
        compiler_params=pltpu.CompilerParams(
            dimension_semantics=("parallel",),
            vmem_limit_bytes=VMEM_LIMIT),
    )(*args)
    return out[:M] if Mp != M else out


# ------------------------------- glue (JAX) -------------------------------

def patchify_nchw(x, p):
    """NCHW -> (B*H/p*W/p, C*p*p) with (c, ph, pw) ordering (matches Conv2d weight)."""
    B, C, H, W = x.shape
    x = x.reshape(B, C, H // p, p, W // p, p)
    x = x.transpose(0, 2, 4, 1, 3, 5)
    return x.reshape(B * (H // p) * (W // p), C * p * p)


def patchify_nhwc(x, p):
    B, H, W, C = x.shape
    x = x.reshape(B, H // p, p, W // p, p, C)
    x = x.transpose(0, 1, 3, 5, 2, 4)
    return x.reshape(B * (H // p) * (W // p), C * p * p)


def convnext_block(tokens, size, p, ksize, final_ln=None):
    B, L, C = tokens.shape
    h, w = size
    g = tokens.reshape(B, h, w, C)                                 # free reshape
    y = dwconv_ln(g, p['dw_w'], p['dw_b'], p['ln_g'], p['ln_b'], ksize)  # bf16
    out = block_mlp(tokens.reshape(B * L, C), y.reshape(B * L, C), p,
                    final_ln=final_ln)
    return out.reshape(B, L, C)


def convnext_forward(x, params, cfg):
    B, _, H, W = x.shape
    p = cfg['patch_size']
    dims = cfg['dims']
    # stem (patchify conv) with the post-stem LayerNorm fused as an epilogue
    tok = matmul_bias(patchify_nchw(x, p), params['stem_w'], params['stem_b'],
                      ln_gb=(params['norm_g'], params['norm_b']))
    size = (H // p, W // p)
    tokens = tok.reshape(B, size[0] * size[1], dims[0])
    n_stages = len(cfg['depths'])
    # down stages
    for i in range(n_stages):
        blocks = params['stages'][i]
        for j, blk in enumerate(blocks):
            is_last_block = (i == n_stages - 1) and (j == len(blocks) - 1)
            final_ln = (params['emb_g'], params['emb_b']) if is_last_block else None
            tokens = convnext_block(tokens, size, blk, cfg['kernel_size'],
                                    final_ln=final_ln)
        if i < len(params['downsample']):
            C = dims[i]
            g = tokens.reshape(B, size[0], size[1], C)
            ds = params['downsample'][i]
            tok = matmul_bias(patchify_nhwc(g, 2), ds['w'], ds['b'])
            size = (size[0] // 2, size[1] // 2)
            tokens = tok.reshape(B, size[0] * size[1], dims[i + 1])
    # up_depths = [] (module default) -> no up stages / upsample.
    Cf = dims[-1]
    if not (n_stages > 0 and len(params['stages'][-1]) > 0):
        # fallback if the embedding norm could not be fused into a last block
        tokens = layernorm(tokens.reshape(-1, Cf),
                           params['emb_g'], params['emb_b']).reshape(B, -1, Cf)
    # tokens_to_grid (reshape=True): (B, L, C) -> NCHW
    out = tokens.reshape(B, size[0], size[1], Cf).transpose(0, 3, 1, 2)
    return out


def init_params(key, cfg):
    state = {'key': key}

    def nxt():
        state['key'], sub = jax.random.split(state['key'])
        return sub

    def w(shape, scale=0.02):
        return scale * jax.random.normal(nxt(), shape, jnp.float32)

    Cin, p = cfg['in_channels'], cfg['patch_size']
    dims, ffs, K = cfg['dims'], cfg['dims_feedforward'], cfg['kernel_size']
    D0 = dims[0]
    params = {
        'stem_w': w((Cin * p * p, D0)).astype(jnp.bfloat16),
        'stem_b': w((D0,)),
        'norm_g': jnp.ones((D0,), jnp.float32),
        'norm_b': jnp.zeros((D0,), jnp.float32),
    }
    stages = []
    for i, depth in enumerate(cfg['depths']):
        C, F = dims[i], ffs[i]
        blocks = []
        for _ in range(depth):
            blocks.append(dict(
                dw_w=w((K, K, C), 0.05), dw_b=w((C,)),
                ln_g=jnp.ones((C,), jnp.float32),
                ln_b=jnp.zeros((C,), jnp.float32),
                # fused [W1 | Wgate] projection (bf16 for the MXU)
                w12=w((C, 2 * F)).astype(jnp.bfloat16), b12=w((2 * F,)),
                w2=w((F, C)).astype(jnp.bfloat16), b2=w((C,)),
            ))
        stages.append(blocks)
    params['stages'] = stages
    params['downsample'] = [
        dict(w=w((dims[i] * 4, dims[i + 1])).astype(jnp.bfloat16),
             b=w((dims[i + 1],)))
        for i in range(len(cfg['depths']) - 1)
    ]
    Df = dims[-1]
    params['emb_g'] = jnp.ones((Df,), jnp.float32)
    params['emb_b'] = jnp.zeros((Df,), jnp.float32)
    return params


if __name__ == "__main__":
    cfg = dict(in_channels=4, depths=(1, 1), dims=(32, 64),
               dims_feedforward=(64, 128), kernel_size=7, patch_size=4)
    key = jax.random.PRNGKey(0)
    kp, kx = jax.random.split(key)
    params = init_params(kp, cfg)
    x = jax.random.normal(kx, (2, 4, 16, 16), jnp.float32)   # NCHW, like PyTorch

    out = convnext_forward(x, params, cfg)
    out = jax.block_until_ready(out)
    assert out.shape == (2, 64, 2, 2), out.shape          # (B, dims[-1], H/8, W/8)
    assert bool(jnp.all(jnp.isfinite(out)))
    print("KERNEL_OK")
</pallas_src>

<mosaic_0001>
module attributes {stable_mosaic.version = 11 : i64} {
  func.func @_matmul_bias_kernel(%arg0: i32, %arg1: memref<32x64xf32, #tpu.memory_space<vmem>>, %arg2: memref<64x32xbf16, #tpu.memory_space<vmem>>, %arg3: memref<1x32xf32, #tpu.memory_space<vmem>>, %arg4: memref<1x32xf32, #tpu.memory_space<vmem>>, %arg5: memref<1x32xf32, #tpu.memory_space<vmem>>, %arg6: memref<32x32xf32, #tpu.memory_space<vmem>>) attributes {dimension_semantics = [#tpu.dimension_semantics<parallel>], iteration_bounds = array<i64: 1>, scalar_prefetch = 0 : i64, scratch_operands = 0 : i64, tpu.core_type = #tpu.core_type<tc>, window_params = [{transform_indices = @transform_0, window_bounds = array<i64: 32, 64>}, {pipeline_mode = #tpu.pipeline_mode<synchronous>, transform_indices = @transform_1, window_bounds = array<i64: 64, 32>}, {pipeline_mode = #tpu.pipeline_mode<synchronous>, transform_indices = @transform_2, window_bounds = array<i64: 1, 32>}, {pipeline_mode = #tpu.pipeline_mode<synchronous>, transform_indices = @transform_3, window_bounds = array<i64: 1, 32>}, {pipeline_mode = #tpu.pipeline_mode<synchronous>, transform_indices = @transform_4, window_bounds = array<i64: 1, 32>}, {transform_indices = @transform_5, window_bounds = array<i64: 32, 32>}]} {
    %c0 = arith.constant 0 : index
    %c0_0 = arith.constant 0 : index
    %0 = vector.load %arg1[%c0, %c0_0] : memref<32x64xf32, #tpu.memory_space<vmem>>, vector<32x64xf32>
    %1 = arith.truncf %0 : vector<32x64xf32> to vector<32x64xbf16>
    %c0_1 = arith.constant 0 : index
    %c0_2 = arith.constant 0 : index
    %2 = vector.load %arg2[%c0_1, %c0_2] : memref<64x32xbf16, #tpu.memory_space<vmem>>, vector<64x32xbf16>
    %cst = arith.constant dense<0.000000e+00> : vector<32x32xf32>
    %3 = tpu.matmul %1, %2, %cst {dimension_numbers = #tpu.dot_dimension_numbers<[1], [0], [0], [1], [0, 0, 1, 1], [], []>} : vector<32x64xbf16>, vector<64x32xbf16>, vector<32x32xf32> -> vector<32x32xf32>
    %c0_3 = arith.constant 0 : index
    %c0_4 = arith.constant 0 : index
    %4 = vector.load %arg3[%c0_3, %c0_4] : memref<1x32xf32, #tpu.memory_space<vmem>>, vector<1x32xf32>
    %5 = vector.broadcast %4 : vector<1x32xf32> to vector<32x32xf32>
    %6 = arith.addf %3, %5 : vector<32x32xf32>
    %cst_5 = arith.constant dense<0.000000e+00> : vector<32xf32>
    %7 = vector.multi_reduction <add>, %6, %cst_5 [1] : vector<32x32xf32> to vector<32xf32>
    %8 = vector.shape_cast %7 : vector<32xf32> to vector<32x1xf32>
    %cst_6 = arith.constant 3.200000e+01 : f32
    %9 = vector.broadcast %cst_6 : f32 to vector<32x1xf32>
    %10 = arith.divf %8, %9 : vector<32x1xf32>
    %11 = vector.broadcast %10 : vector<32x1xf32> to vector<32x32xf32>
    %12 = arith.subf %6, %11 : vector<32x32xf32>
    %13 = arith.mulf %12, %12 : vector<32x32xf32>
    %cst_7 = arith.constant dense<0.000000e+00> : vector<32xf32>
    %14 = vector.multi_reduction <add>, %13, %cst_7 [1] : vector<32x32xf32> to vector<32xf32>
    %15 = vector.shape_cast %14 : vector<32xf32> to vector<32x1xf32>
    %cst_8 = arith.constant 3.200000e+01 : f32
    %16 = vector.broadcast %cst_8 : f32 to vector<32x1xf32>
    %17 = arith.divf %15, %16 : vector<32x1xf32>
    %cst_9 = arith.constant 9.99999974E-6 : f32
    %18 = vector.broadcast %cst_9 : f32 to vector<32x1xf32>
    %19 = arith.addf %17, %18 : vector<32x1xf32>
    %20 = math.rsqrt %19 : vector<32x1xf32>
    %21 = vector.broadcast %20 : vector<32x1xf32> to vector<32x32xf32>
    %22 = arith.mulf %12, %21 : vector<32x32xf32>
    %c0_10 = arith.constant 0 : index
    %c0_11 = arith.constant 0 : index
    %23 = vector.load %arg4[%c0_10, %c0_11] : memref<1x32xf32, #tpu.memory_space<vmem>>, vector<1x32xf32>
    %24 = vector.broadcast %23 : vector<1x32xf32> to vector<32x32xf32>
    %25 = arith.mulf %22, %24 : vector<32x32xf32>
    %c0_12 = arith.constant 0 : index
    %c0_13 = arith.constant 0 : index
    %26 = vector.load %arg5[%c0_12, %c0_13] : memref<1x32xf32, #tpu.memory_space<vmem>>, vector<1x32xf32>
    %27 = vector.broadcast %26 : vector<1x32xf32> to vector<32x32xf32>
    %28 = arith.addf %25, %27 : vector<32x32xf32>
    %c0_14 = arith.constant 0 : index
    %c0_15 = arith.constant 0 : index
    %29 = vector.load %arg6[%c0_14, %c0_15] : memref<32x32xf32, #tpu.memory_space<vmem>>, vector<32x32xf32>
    tpu.vector_store %arg6[%c0_14, %c0_15], %28 {strides = array<i32>} : memref<32x32xf32, #tpu.memory_space<vmem>>, vector<32x32xf32>,
    return
  }
  func.func @transform_0(%arg0: i32) -> (i32, i32) {
    %c0_i32 = arith.constant 0 : i32
    %c0_i32_0 = arith.constant 0 : i32
    return %arg0, %c0_i32 : i32, i32
  }
  func.func @transform_1(%arg0: i32) -> (i32, i32) {
    %c0_i32 = arith.constant 0 : i32
    %c0_i32_0 = arith.constant 0 : i32
    %c0_i32_1 = arith.constant 0 : i32
    return %c0_i32, %c0_i32_0 : i32, i32
  }
  func.func @transform_2(%arg0: i32) -> (i32, i32) {
    %c0_i32 = arith.constant 0 : i32
    %c0_i32_0 = arith.constant 0 : i32
    %c0_i32_1 = arith.constant 0 : i32
    return %c0_i32, %c0_i32_0 : i32, i32
  }
  func.func @transform_3(%arg0: i32) -> (i32, i32) {
    %c0_i32 = arith.constant 0 : i32
    %c0_i32_0 = arith.constant 0 : i32
    %c0_i32_1 = arith.constant 0 : i32
    return %c0_i32, %c0_i32_0 : i32, i32
  }
  func.func @transform_4(%arg0: i32) -> (i32, i32) {
    %c0_i32 = arith.constant 0 : i32
    %c0_i32_0 = arith.constant 0 : i32
    %c0_i32_1 = arith.constant 0 : i32
    return %c0_i32, %c0_i32_0 : i32, i32
  }
  func.func @transform_5(%arg0: i32) -> (i32, i32) {
    %c0_i32 = arith.constant 0 : i32
    %c0_i32_0 = arith.constant 0 : i32
    return %arg0, %c0_i32 : i32, i32
  }
}

</mosaic_0001>

<llo_original>
// kernel: tpu_custom_call.1
$region0: #{tpu_custom_call.1}
  #allocation0 [shape = 'u32[]', space=smem, size = 0x4, offset = 0x4, fixed_abs, tag = 'smem constant byte address 0x4 - core index']
  #allocation1 [shape = 'u32[144,128]{1,0:T(1,128)}', space=vmem, size = 0x12000, scoped, tag = 'internal scratch']
  %s0 = inlined_call_operand.vmem [shape: f32[32,64], index: 0, kind: input, shape index: {}]
  %s1 = inlined_call_operand.vmem [shape: bf16[64,32], index: 1, kind: input, shape index: {}]
  %s2 = inlined_call_operand.vmem [shape: f32[1,32], index: 2, kind: input, shape index: {}]
  %s3 = inlined_call_operand.vmem [shape: f32[1,32], index: 3, kind: input, shape index: {}]
  %s4 = inlined_call_operand.vmem [shape: f32[1,32], index: 4, kind: input, shape index: {}]
  %s5 = inlined_call_operand.hbm [shape: f32[32,32], index: 5, kind: output, shape index: {}]
  %s6 = sld [smem:[#allocation0]]
  $region30: #{tpu_custom_call.1} parent=0
    _
  %s8 = ssub.s32 1, %s6
  %s9 = scalar_select 0, %s8, %s6
  $region1: #{tpu_custom_call.1} parent=0
    #allocation2 [shape = 'u8[16384]{0}', space=vmem, size = 0x4000, scoped, tag = 'output window, operand 0, single buffered']
    #allocation3 [shape = 's32[1]{0}', space=sflag, size = 0x4, scoped, tag = 'scoped memory for tpu_custom_call.1']
    %10 = vsyncpa [#allocation3], 0
    // Predicated region
    $region2: #{tpu_custom_call.1} parent=1 // pred_check
      _
    $region3: #{tpu_custom_call.1} parent=1 // pred_check_branch
      %12 = sbr.rel (0) target = $region5
    $region4: #{tpu_custom_call.1} parent=1 // pred_region
      _
    $region5: #{tpu_custom_call.1} parent=1 // pred_fallthru
      _
    // Predicated region
    $region6: #{tpu_custom_call.1} parent=1 // pred_check
      _
    $region7: #{tpu_custom_call.1} parent=1 // pred_check_branch
      %14 = sbr.rel (0) target = $region9
    $region8: #{tpu_custom_call.1} parent=1 // pred_region
      _
    $region9: #{tpu_custom_call.1} parent=1 // pred_fallthru
      _
    // Predicated region
    $region10: #{tpu_custom_call.1} parent=1 // pred_check
      _
    $region11: #{tpu_custom_call.1} parent=1 // pred_check_branch
      %16 = sbr.rel (0) target = $region13
    $region12: #{tpu_custom_call.1} parent=1 // pred_region
      _
    $region13: #{tpu_custom_call.1} parent=1 // pred_fallthru
      _
    // Predicated region
    $region14: #{tpu_custom_call.1} parent=1 // pred_check
      _
    $region15: #{tpu_custom_call.1} parent=1 // pred_check_branch
      %18 = sbr.rel (0) target = $region17
    $region16: #{tpu_custom_call.1} parent=1 // pred_region
      _
    $region17: #{tpu_custom_call.1} parent=1 // pred_fallthru
      _
    // Predicated region
    $region18: #{tpu_custom_call.1} parent=1 // pred_check
      _
    $region19: #{tpu_custom_call.1} parent=1 // pred_check_branch
      %20 = sbr.rel (0) target = $region21
    $region20: #{tpu_custom_call.1} parent=1 // pred_region
      _
    $region21: #{tpu_custom_call.1} parent=1 // pred_fallthru
      _
    %v22 = vld [vmem:[%s0] sm:$0xff]
    %v23 = vld [vmem:[%s0 + $0x8] sm:$0xff]
    %v24 = vld [vmem:[%s0 + $0x10] sm:$0xff]
    %v25 = vld [vmem:[%s0 + $0x18] sm:$0xff]
    %v26 = vpack.c.bf16 %v23, %v22
    %v27 = vpack.c.bf16 %v25, %v24
    %v28 = vld [vmem:[%s1] sm:$0xf]
    %v29 = vld [vmem:[%s1 + $0x4] sm:$0xf]
    %v30 = vld [vmem:[%s1 + $0x8] sm:$0xf]
    %v31 = vld [vmem:[%s1 + $0xc] sm:$0xf]
    %v32 = vld [vmem:[%s1 + $0x10] sm:$0xf]
    %v33 = vld [vmem:[%s1 + $0x14] sm:$0xf]
    %v34 = vld [vmem:[%s1 + $0x18] sm:$0xf]
    %v35 = vld [vmem:[%s1 + $0x1c] sm:$0xf]
    %v36 = vld [vmem:[%s2] sm:$0x1]
    %v38 = vlaneseq
    %v39 = vshrl.u32 %v38, 7
    %v40 = vsub.s32 0, %v39
    %v41 = vrot.slane %v36, %v40
    %v51 = vunpack.c.l.b16 %v28
    %v52 = vunpack.c.l.b16 %v29
    %v53 = vunpack.c.l.b16 %v30
    %v54 = vunpack.c.l.b16 %v31
    %v55 = vunpack.c.l.b16 %v32
    %v56 = vunpack.c.l.b16 %v33
    %v57 = vunpack.c.l.b16 %v34
    %v58 = vunpack.c.l.b16 %v35
    %v59 = vpack.c.b16 %v52, %v51
    %v60 = vpack.c.b16 %v54, %v53
    %v61 = vpack.c.b16 %v56, %v55
    %v62 = vpack.c.b16 %v58, %v57
    %vm67 = vcmask 523264
    %v69 = vsel %vm67, %v26, 0
    %v72 = vsel %vm67, %v27, 0
    %74 = vmatprep.subr.bf16.mxu0 0
    %75 = vmatpush1.bf16.msra.mxu0 %v59
    %76 = vmatprep.subr.bf16.mxu0 0
    %77 = vmatpush1.bf16.msra.mxu0 %v60
    %78 = vmatprep.subr.bf16.mxu0 0
    %79 = vmatpush1.bf16.msra.mxu0 %v61
    %80 = vmatprep.subr.bf16.mxu0 0
    %81 = vmatpush1.bf16.msra.mxu0 %v62
    %82 = vmatprep.subr.bf16.mxu0 0
    %83 = vmatpush1.bf16.msra.mxu0 0
    %84 = vmatprep.subr.bf16.mxu0 0
    %85 = vmatpush1.bf16.msra.mxu0 0
    %86 = vmatprep.subr.bf16.mxu0 0
    %87 = vmatpush1.bf16.msra.mxu0 0
    %88 = vmatprep.subr.bf16.mxu0 0
    %89 = vmatpush1.bf16.msra.mxu0 0
    %90 = vmatprep.subr.bf16.mxu0 0
    %91 = vmatpush1.bf16.msra.mxu0 0
    %92 = vmatprep.subr.bf16.mxu0 0
    %93 = vmatpush1.bf16.msra.mxu0 0
    %94 = vmatprep.subr.bf16.mxu0 0
    %95 = vmatpush1.bf16.msra.mxu0 0
    %96 = vmatprep.subr.bf16.mxu0 0
    %97 = vmatpush1.bf16.msra.mxu0 0
    %98 = vmatprep.subr.bf16.mxu0 0
    %99 = vmatpush1.bf16.msra.mxu0 0
    %100 = vmatprep.subr.bf16.mxu0 0
    %101 = vmatpush1.bf16.msra.mxu0 0
    %102 = vmatprep.subr.bf16.mxu0 0
    %103 = vmatpush1.bf16.msra.mxu0 0
    %104 = vmatprep.subr.bf16.mxu0 0
    %105 = vmatpush1.bf16.msra.mxu0 0
    %106 = vmatprep.mubr.bf16.mxu0 0
    %107 = vmatmul.mubr.bf16.gmra.mrb[0].mxu0 %v69
    %v108 = vpop.f32.mrb[0].mxu0
    %v109 = vadd.f32 %v41, %v108
    %v110 = vpop.f32.mrb[0].mxu0
    %v111 = vpop.f32.mrb[0].mxu0
    %v112 = vadd.f32 %v41, %v111
    %v113 = vpop.f32.mrb[0].mxu0
    %114 = vmatprep.mubr.bf16.mxu0 0
    %115 = vmatmul.mubr.bf16.gmra.mrb[0].mxu0 %v72
    %v116 = vpop.f32.mrb[0].mxu0
    %v117 = vadd.f32 %v41, %v116
    %v118 = vpop.f32.mrb[0].mxu0
    %v119 = vpop.f32.mrb[0].mxu0
    %v120 = vadd.f32 %v41, %v119
    %v121 = vpop.f32.mrb[0].mxu0
    %122 = vdwg.mxu0
    %vm123 = vcmask 261120
    %v124 = vsel %vm123, %v109, 0.0
    %125 = vadd.xlane.f32.xlu0 %v124
    %v126 = vpop.xlane.xlu0 %125
    %v127 = vsel %vm123, %v112, 0.0
    %128 = vadd.xlane.f32.xlu0 %v127
    %v129 = vpop.xlane.xlu0 %128
    %v130 = vsel %vm123, %v117, 0.0
    %131 = vadd.xlane.f32.xlu0 %v130
    %v132 = vpop.xlane.xlu0 %131
    %v133 = vsel %vm123, %v120, 0.0
    %134 = vadd.xlane.f32.xlu0 %v133
    %v135 = vpop.xlane.xlu0 %134
    %v136 = vrcp.pop 32.0
    %v137 = vmul.f32 %v126, %v136
    %v138 = vmul.f32 %v129, %v136
    %v139 = vmul.f32 %v132, %v136
    %v140 = vmul.f32 %v135, %v136
    %v141 = vsub.f32 %v109, %v137
    %v142 = vsub.f32 %v112, %v138
    %v143 = vsub.f32 %v117, %v139
    %v144 = vsub.f32 %v120, %v140
    %v145 = vmul.f32 %v141, %v141
    %v146 = vmul.f32 %v142, %v142
    %v147 = vmul.f32 %v143, %v143
    %v148 = vmul.f32 %v144, %v144
    %v149 = vsel %vm123, %v145, 0.0
    %150 = vadd.xlane.f32.xlu0 %v149
    %v151 = vpop.xlane.xlu0 %150
    %v152 = vsel %vm123, %v146, 0.0
    %153 = vadd.xlane.f32.xlu0 %v152
    %v154 = vpop.xlane.xlu0 %153
    %v155 = vsel %vm123, %v147, 0.0
    %156 = vadd.xlane.f32.xlu0 %v155
    %v157 = vpop.xlane.xlu0 %156
    %v158 = vsel %vm123, %v148, 0.0
    %159 = vadd.xlane.f32.xlu0 %v158
    %v160 = vpop.xlane.xlu0 %159
    %v161 = vmul.f32 %v151, %v136
    %v162 = vmul.f32 %v154, %v136
    %v163 = vmul.f32 %v157, %v136
    %v164 = vmul.f32 %v160, %v136
    %v165 = vadd.f32 %v161, 1e-05
    %v166 = vadd.f32 %v162, 1e-05
    %v167 = vadd.f32 %v163, 1e-05
    %v168 = vadd.f32 %v164, 1e-05
    %v169 = vrsqrt.pop %v165
    %v170 = vrsqrt.pop %v166
    %v171 = vrsqrt.pop %v167
    %v172 = vrsqrt.pop %v168
    %v173 = vmul.f32 %v141, %v169
    %v174 = vmul.f32 %v142, %v170
    %v175 = vmul.f32 %v143, %v171
    %v176 = vmul.f32 %v144, %v172
    %v177 = vld [vmem:[%s3] sm:$0x1]
    %v179 = vlaneseq
    %v180 = vshrl.u32 %v179, 7
    %v181 = vsub.s32 0, %v180
    %v182 = vrot.slane %v177, %v181
    %v184 = vmul.f32 %v173, %v182
    %v185 = vmul.f32 %v174, %v182
    %v186 = vmul.f32 %v175, %v182
    %v187 = vmul.f32 %v176, %v182
    %v188 = vld [vmem:[%s4] sm:$0x1]
    %v190 = vlaneseq
    %v191 = vshrl.u32 %v190, 7
    %v192 = vsub.s32 0, %v191
    %v193 = vrot.slane %v188, %v192
    %v195 = vadd.f32 %v184, %v193
    %v196 = vadd.f32 %v185, %v193
    %v197 = vadd.f32 %v186, %v193
    %v198 = vadd.f32 %v187, %v193
    %199 = vst.msk [vmem:[#allocation2] sm:$0xff] %vm123, %v195
    %200 = vst.msk [vmem:[#allocation2 + $0x8] sm:$0xff] %vm123, %v196
    %201 = vst.msk [vmem:[#allocation2 + $0x10] sm:$0xff] %vm123, %v197
    %202 = vst.msk [vmem:[#allocation2 + $0x18] sm:$0xff] %vm123, %v198
    // Predicated region
    $region22: #{tpu_custom_call.1} parent=1 // pred_check
      _
    $region23: #{tpu_custom_call.1} parent=1 // pred_check_branch
      %204 = sbr.rel (0) target = $region25
    $region24: #{tpu_custom_call.1} parent=1 // pred_region
      %s206 = ssub.s32 512, 512
      %207 = vsyncadd [#allocation3], %s206
      %s208 = sshll.u32 [#allocation2], 4
      %s209 = int_to_ptr.vmem [resolvable:$true] %s208
      %214 = dma.vmem_to_hbm [thread:$0]  %s209, 512, %s5, [#allocation3], 128, 128, 8
    $region25: #{tpu_custom_call.1} parent=1 // pred_fallthru
      _
    // Predicated region
    $region26: #{tpu_custom_call.1} parent=1 // pred_check
      _
    $region27: #{tpu_custom_call.1} parent=1 // pred_check_branch
      %216 = sbr.rel (0) target = $region29
    $region28: #{tpu_custom_call.1} parent=1 // pred_region
      %217 = dma.done [#allocation3], 512
    $region29: #{tpu_custom_call.1} parent=1 // pred_fallthru
      _
    %218 = vsyncpa [#allocation3], 1

</llo_original>
